<compile_context>
chip_gen: v6e
topology: v6e:2x2x1
jax: 0.10.0
libtpu: 0.0.40
codegen_flags: <defaults>
</compile_context>

<pallas_src>
import jax
import jax.numpy as jnp
from jax.experimental import pallas as pl
from jax.experimental.pallas import tpu as pltpu  # noqa: F401  (TPU backend)


def _round_up(x, m):
    return (x + m - 1) // m * m


def lstm_decoder_kernel(xh_ref, w_ref, b_ref, c0_ref, wlin_ref, blin_ref,
                        hn_ref, cn_ref, lin_ref):
    """Single LSTM step (PyTorch gate order [i, f, g, o]) + fused probabilistic-linear head.

    xh_ref  : (Bp, Kp)   concatenated [x | h0], h0 at column I, zero padding after I+H
    w_ref   : (Kp, Gp)   fused [W_ih^T ; W_hh^T], gate k at columns k*H, zeros in padding
    b_ref   : (1, Gp)    b_ih + b_hh, zeros in padding
    c0_ref  : (Bp, H)    initial cell state (zero in padded batch rows)
    wlin_ref: (1, H)     sampled linear weight
    blin_ref: (1, 1)     sampled linear bias
    hn_ref  : (Bp, H), cn_ref: (Bp, H), lin_ref: (Bp, 1)
    """
    H = cn_ref.shape[-1]

    # One fused MXU matmul: x@W_ih^T + h0@W_hh^T + (b_ih + b_hh)
    gates = (jnp.dot(xh_ref[...], w_ref[...], preferred_element_type=jnp.float32)
             + b_ref[...])                                  # (Bp, Gp)

    i_g = jax.nn.sigmoid(gates[:, 0 * H:1 * H])
    f_g = jax.nn.sigmoid(gates[:, 1 * H:2 * H])
    g_g = jnp.tanh(gates[:, 2 * H:3 * H])
    o_g = jax.nn.sigmoid(gates[:, 3 * H:4 * H])

    c_new = f_g * c0_ref[...] + i_g * g_g
    h_new = o_g * jnp.tanh(c_new)

    hn_ref[...] = h_new
    cn_ref[...] = c_new

    # Probabilistic-linear head (out_features = 1): VPU multiply + XLU lane reduce.
    lin_ref[...] = (jnp.sum(h_new * wlin_ref[...], axis=-1, keepdims=True)
                    + blin_ref[...])


def pack_lstm_decoder_params(w_ih, w_hh, b_ih, b_hh):
    """One-time packing of the LSTM weights (hoisted out of the per-step path).

    w_ih: (4H, I), w_hh: (4H, H), b_*: (4H,)  (PyTorch layout, gate order [i,f,g,o]).
    Returns w_packed (Kp, Gp), b_packed (1, Gp) with Kp = round_up(I+H, 128),
    Gp = round_up(4H, 128); gate k lives at columns k*H, W_hh^T at rows I..I+H.
    """
    f32 = jnp.float32
    fourH, I = w_ih.shape
    H = fourH // 4
    K = I + H
    Kp = _round_up(K, 128)
    Gp = _round_up(4 * H, 128)

    w = jnp.zeros((Kp, Gp), f32)
    w = w.at[:I, :4 * H].set(jnp.asarray(w_ih, f32).T)          # (I, 4H)
    w = w.at[I:I + H, :4 * H].set(jnp.asarray(w_hh, f32).T)     # (H, 4H)
    b = jnp.zeros((1, Gp), f32)
    b = b.at[0, :4 * H].set(jnp.asarray(b_ih, f32) + jnp.asarray(b_hh, f32))
    return w, b


@jax.jit
def lstm_decoder_forward(x, h0, c0, w_packed, b_packed,
                         w_val, w_var, b_val, b_var, key, eps=1e-6):
    """x: (B, I); h0/c0: (1, B, H); w_packed/b_packed from pack_lstm_decoder_params;
    w_val/w_var: (1, H); b_val/b_var: (1,).
    Returns (output (B, 1), (h_n (1, B, H), c_n (1, B, H)))."""
    f32 = jnp.float32
    B, I = x.shape
    H = c0.shape[-1]
    Bp = _round_up(B, 8)               # sublane alignment
    Kp = w_packed.shape[0]

    # Per-step activation packing only (weights are pre-packed).
    xh = jnp.zeros((Bp, Kp), f32)
    xh = xh.at[:B, :I].set(x.astype(f32))
    xh = xh.at[:B, I:I + H].set(h0[0].astype(f32))
    c0p = jnp.zeros((Bp, H), f32).at[:B].set(c0[0].astype(f32))

    # Probabilistic linear layer: rsample from Normal(val, |var| + eps).
    kw, kb = jax.random.split(key)
    w_lin = (jnp.asarray(w_val, f32)
             + (jnp.abs(jnp.asarray(w_var, f32)) + eps)
             * jax.random.normal(kw, w_val.shape, f32))         # (1, H)
    b_lin = (jnp.asarray(b_val, f32)
             + (jnp.abs(jnp.asarray(b_var, f32)) + eps)
             * jax.random.normal(kb, b_val.shape, f32))         # (1,)
    b_lin = b_lin.reshape(1, 1)

    out_shapes = (
        jax.ShapeDtypeStruct((Bp, H), f32),    # h_n (batch-padded)
        jax.ShapeDtypeStruct((Bp, H), f32),    # c_n (batch-padded)
        jax.ShapeDtypeStruct((Bp, 1), f32),    # linear output (batch-padded)
    )

    # Single fused, gridless kernel invocation (everything resident in VMEM).
    h_n_p, c_n_p, lin_p = pl.pallas_call(
        lstm_decoder_kernel,
        out_shape=out_shapes,
    )(xh, w_packed, b_packed, c0p, w_lin, b_lin)

    output = lin_p[:B]                 # (B, 1)
    h_n = h_n_p[:B][None]              # (1, B, H)
    c_n = c_n_p[:B][None]              # (1, B, H)
    return output, (h_n, c_n)


def lstm_decoder_reference(x, h0, c0, w_ih, w_hh, b_ih, b_hh,
                           w_val, w_var, b_val, b_var, key, eps=1e-6):
    """Pure-JAX reference matching the PyTorch lstm_decoder forward."""
    H = w_hh.shape[1]
    h = h0[0]
    c = c0[0]
    gates = x @ w_ih.T + h @ w_hh.T + (b_ih + b_hh)
    i_g = jax.nn.sigmoid(gates[:, 0 * H:1 * H])
    f_g = jax.nn.sigmoid(gates[:, 1 * H:2 * H])
    g_g = jnp.tanh(gates[:, 2 * H:3 * H])
    o_g = jax.nn.sigmoid(gates[:, 3 * H:4 * H])
    c_new = f_g * c + i_g * g_g
    h_new = o_g * jnp.tanh(c_new)

    kw, kb = jax.random.split(key)
    w_lin = w_val + (jnp.abs(w_var) + eps) * jax.random.normal(kw, w_val.shape)
    b_lin = b_val + (jnp.abs(b_var) + eps) * jax.random.normal(kb, b_val.shape)
    output = h_new @ w_lin.T + b_lin
    return output, (h_new[None], c_new[None])


if __name__ == "__main__":
    # Shapes consistent with the module: x_input (batch, input_size),
    # encoder_hidden_states = (h0, c0) each (num_layers=1, batch, hidden_size).
    BATCH, INPUT, HIDDEN = 4, 16, 32

    key = jax.random.PRNGKey(0)
    keys = jax.random.split(key, 10)

    x = jax.random.normal(keys[0], (BATCH, INPUT), jnp.float32)
    h0 = jax.random.normal(keys[1], (1, BATCH, HIDDEN), jnp.float32)
    c0 = jax.random.normal(keys[2], (1, BATCH, HIDDEN), jnp.float32)

    # LSTM params mimicking PyTorch's U(-1/sqrt(H), 1/sqrt(H)).
    bound = 1.0 / (HIDDEN ** 0.5)
    w_ih = jax.random.uniform(keys[3], (4 * HIDDEN, INPUT), jnp.float32, -bound, bound)
    w_hh = jax.random.uniform(keys[4], (4 * HIDDEN, HIDDEN), jnp.float32, -bound, bound)
    b_ih = jax.random.uniform(keys[5], (4 * HIDDEN,), jnp.float32, -bound, bound)
    b_hh = jax.random.uniform(keys[6], (4 * HIDDEN,), jnp.float32, -bound, bound)

    # probabilistic_linear_layer params (in_features=HIDDEN, out_features=1, fan_in init).
    kaiming = (6.0 / HIDDEN) ** 0.5
    w_val = jax.random.normal(keys[7], (1, HIDDEN), jnp.float32) * kaiming
    w_var = jnp.ones((1, HIDDEN), jnp.float32) * kaiming
    b_val = jax.random.normal(keys[8], (1,), jnp.float32) * kaiming
    b_var = jnp.ones((1,), jnp.float32) * kaiming
    sample_key = keys[9]

    # One-time weight packing (hoisted out of the per-step decode path).
    w_packed, b_packed = pack_lstm_decoder_params(w_ih, w_hh, b_ih, b_hh)
    w_packed, b_packed = jax.block_until_ready((w_packed, b_packed))

    output, (h_n, c_n) = lstm_decoder_forward(
        x, h0, c0, w_packed, b_packed, w_val, w_var, b_val, b_var, sample_key)
    jax.block_until_ready((output, h_n, c_n))

    ref_out, (ref_h, ref_c) = lstm_decoder_reference(
        x, h0, c0, w_ih, w_hh, b_ih, b_hh, w_val, w_var, b_val, b_var, sample_key)

    assert output.shape == (BATCH, 1)
    assert h_n.shape == (1, BATCH, HIDDEN) and c_n.shape == (1, BATCH, HIDDEN)
    assert jnp.allclose(output, ref_out, atol=1e-4, rtol=1e-4)
    assert jnp.allclose(h_n, ref_h, atol=1e-4, rtol=1e-4)
    assert jnp.allclose(c_n, ref_c, atol=1e-4, rtol=1e-4)

    print("KERNEL_OK")
</pallas_src>

<mosaic_0001>
module attributes {stable_mosaic.version = 11 : i64} {
  func.func @lstm_decoder_kernel(%arg0: memref<8x128xf32, #tpu.memory_space<vmem>>, %arg1: memref<128x128xf32, #tpu.memory_space<vmem>>, %arg2: memref<1x128xf32, #tpu.memory_space<vmem>>, %arg3: memref<8x32xf32, #tpu.memory_space<vmem>>, %arg4: memref<1x32xf32, #tpu.memory_space<vmem>>, %arg5: memref<1x1xf32, #tpu.memory_space<vmem>>, %arg6: memref<8x32xf32, #tpu.memory_space<vmem>>, %arg7: memref<8x32xf32, #tpu.memory_space<vmem>>, %arg8: memref<8x1xf32, #tpu.memory_space<vmem>>) attributes {dimension_semantics = [], scalar_prefetch = 0 : i64, scratch_operands = 0 : i64, tpu.core_type = #tpu.core_type<tc>} {
    %c0 = arith.constant 0 : index
    %c0_0 = arith.constant 0 : index
    %0 = vector.load %arg0[%c0, %c0_0] : memref<8x128xf32, #tpu.memory_space<vmem>>, vector<8x128xf32>
    %c0_1 = arith.constant 0 : index
    %c0_2 = arith.constant 0 : index
    %1 = vector.load %arg1[%c0_1, %c0_2] : memref<128x128xf32, #tpu.memory_space<vmem>>, vector<128x128xf32>
    %cst = arith.constant dense<0.000000e+00> : vector<8x128xf32>
    %2 = tpu.matmul %0, %1, %cst {dimension_numbers = #tpu.dot_dimension_numbers<[1], [0], [0], [1], [0, 0, 1, 1], [], []>} : vector<8x128xf32>, vector<128x128xf32>, vector<8x128xf32> -> vector<8x128xf32>
    %c0_3 = arith.constant 0 : index
    %c0_4 = arith.constant 0 : index
    %3 = vector.load %arg2[%c0_3, %c0_4] : memref<1x128xf32, #tpu.memory_space<vmem>>, vector<1x128xf32>
    %4 = vector.broadcast %3 : vector<1x128xf32> to vector<8x128xf32>
    %5 = arith.addf %2, %4 : vector<8x128xf32>
    %6 = vector.extract_strided_slice %5 {offsets = [0, 0], sizes = [8, 32], strides = [1, 1]} : vector<8x128xf32> to vector<8x32xf32>
    %7 = arith.negf %6 : vector<8x32xf32>
    %8 = math.exp %7 : vector<8x32xf32>
    %cst_5 = arith.constant 1.000000e+00 : f32
    %9 = vector.broadcast %cst_5 : f32 to vector<8x32xf32>
    %10 = arith.addf %9, %8 : vector<8x32xf32>
    %11 = arith.divf %9, %10 : vector<8x32xf32>
    %12 = vector.extract_strided_slice %5 {offsets = [0, 32], sizes = [8, 32], strides = [1, 1]} : vector<8x128xf32> to vector<8x32xf32>
    %13 = arith.negf %12 : vector<8x32xf32>
    %14 = math.exp %13 : vector<8x32xf32>
    %cst_6 = arith.constant 1.000000e+00 : f32
    %15 = vector.broadcast %cst_6 : f32 to vector<8x32xf32>
    %16 = arith.addf %15, %14 : vector<8x32xf32>
    %17 = arith.divf %15, %16 : vector<8x32xf32>
    %18 = vector.extract_strided_slice %5 {offsets = [0, 64], sizes = [8, 32], strides = [1, 1]} : vector<8x128xf32> to vector<8x32xf32>
    %19 = math.tanh %18 : vector<8x32xf32>
    %20 = vector.extract_strided_slice %5 {offsets = [0, 96], sizes = [8, 32], strides = [1, 1]} : vector<8x128xf32> to vector<8x32xf32>
    %21 = arith.negf %20 : vector<8x32xf32>
    %22 = math.exp %21 : vector<8x32xf32>
    %cst_7 = arith.constant 1.000000e+00 : f32
    %23 = vector.broadcast %cst_7 : f32 to vector<8x32xf32>
    %24 = arith.addf %23, %22 : vector<8x32xf32>
    %25 = arith.divf %23, %24 : vector<8x32xf32>
    %c0_8 = arith.constant 0 : index
    %c0_9 = arith.constant 0 : index
    %26 = vector.load %arg3[%c0_8, %c0_9] : memref<8x32xf32, #tpu.memory_space<vmem>>, vector<8x32xf32>
    %27 = arith.mulf %17, %26 : vector<8x32xf32>
    %28 = arith.mulf %11, %19 : vector<8x32xf32>
    %29 = arith.addf %27, %28 : vector<8x32xf32>
    %30 = math.tanh %29 : vector<8x32xf32>
    %31 = arith.mulf %25, %30 : vector<8x32xf32>
    %c0_10 = arith.constant 0 : index
    %c0_11 = arith.constant 0 : index
    %32 = vector.load %arg6[%c0_10, %c0_11] : memref<8x32xf32, #tpu.memory_space<vmem>>, vector<8x32xf32>
    tpu.vector_store %arg6[%c0_10, %c0_11], %31 {strides = array<i32>} : memref<8x32xf32, #tpu.memory_space<vmem>>, vector<8x32xf32>,
    %c0_12 = arith.constant 0 : index
    %c0_13 = arith.constant 0 : index
    %33 = vector.load %arg7[%c0_12, %c0_13] : memref<8x32xf32, #tpu.memory_space<vmem>>, vector<8x32xf32>
    tpu.vector_store %arg7[%c0_12, %c0_13], %29 {strides = array<i32>} : memref<8x32xf32, #tpu.memory_space<vmem>>, vector<8x32xf32>,
    %c0_14 = arith.constant 0 : index
    %c0_15 = arith.constant 0 : index
    %34 = vector.load %arg4[%c0_14, %c0_15] : memref<1x32xf32, #tpu.memory_space<vmem>>, vector<1x32xf32>
    %35 = vector.broadcast %34 : vector<1x32xf32> to vector<8x32xf32>
    %36 = arith.mulf %31, %35 : vector<8x32xf32>
    %cst_16 = arith.constant dense<0.000000e+00> : vector<8xf32>
    %37 = vector.multi_reduction <add>, %36, %cst_16 [1] : vector<8x32xf32> to vector<8xf32>
    %38 = vector.shape_cast %37 : vector<8xf32> to vector<8x1xf32>
    %c0_17 = arith.constant 0 : index
    %c0_18 = arith.constant 0 : index
    %39 = vector.load %arg5[%c0_17, %c0_18] : memref<1x1xf32, #tpu.memory_space<vmem>>, vector<1x1xf32>
    %40 = vector.broadcast %39 : vector<1x1xf32> to vector<8x1xf32>
    %41 = arith.addf %38, %40 : vector<8x1xf32>
    %c0_19 = arith.constant 0 : index
    %c0_20 = arith.constant 0 : index
    %42 = vector.load %arg8[%c0_19, %c0_20] : memref<8x1xf32, #tpu.memory_space<vmem>>, vector<8x1xf32>
    tpu.vector_store %arg8[%c0_19, %c0_20], %41 {strides = array<i32>} : memref<8x1xf32, #tpu.memory_space<vmem>>, vector<8x1xf32>,
    return
  }
}

</mosaic_0001>

<llo_original>
// kernel: lstm_decoder_forward.3
$region0: #{lstm_decoder_forward.3}
  #allocation0 [shape = 'u32[]', space=smem, size = 0x4, offset = 0x4, fixed_abs, tag = 'smem constant byte address 0x4 - core index']
  #allocation1 [shape = 'u32[144,128]{1,0:T(1,128)}', space=vmem, size = 0x12000, scoped, tag = 'internal scratch']
  #allocation2 [shape = 'f32[1,1]{1,0:T(1,128)S(1)}', space=vmem, size = 0x200, scoped, tag = 'scoped memory for lstm_decoder_forward.3']
  %s0 = inlined_call_operand.vmem [shape: f32[8,128], index: 0, kind: input, shape index: {}]
  %s1 = inlined_call_operand.vmem [shape: f32[128,128], index: 1, kind: input, shape index: {}]
  %s2 = inlined_call_operand.vmem [shape: f32[1,128], index: 2, kind: input, shape index: {}]
  %s3 = inlined_call_operand.vmem [shape: f32[8,32], index: 3, kind: input, shape index: {}]
  %s4 = inlined_call_operand.vmem [shape: f32[1,32], index: 4, kind: input, shape index: {}]
  %s5 = inlined_call_operand.<no memory space> [shape: f32[1,1], index: 5, kind: input, shape index: {}]
  %s6 = inlined_call_operand.vmem [shape: f32[8,32], index: 6, kind: output, shape index: {0}]
  %s7 = inlined_call_operand.vmem [shape: f32[8,32], index: 7, kind: output, shape index: {1}]
  %s8 = inlined_call_operand.vmem [shape: f32[8,1], index: 8, kind: output, shape index: {2}]
  %9 = xla_tuple %s6, %s7, %s8
  %s10 = sld [smem:[#allocation0]]
  $region50: #{lstm_decoder_forward.3} parent=0
    _
  %s12 = ssub.s32 1, %s10
  %s13 = scalar_select 0, %s12, %s10
  %v14 = vstv %s5
  %15 = vst [vmem:[#allocation2] sm:$0x1] %v14
  // Predicated region
  $region2: #{lstm_decoder_forward.3} parent=0 // pred_check
    _
  $region3: #{lstm_decoder_forward.3} parent=0 // pred_check_branch
    %17 = sbr.rel (0) target = $region5
  $region4: #{lstm_decoder_forward.3} parent=0 // pred_region
    _
  $region5: #{lstm_decoder_forward.3} parent=0 // pred_fallthru
    _
  // Predicated region
  $region6: #{lstm_decoder_forward.3} parent=0 // pred_check
    _
  $region7: #{lstm_decoder_forward.3} parent=0 // pred_check_branch
    %19 = sbr.rel (0) target = $region9
  $region8: #{lstm_decoder_forward.3} parent=0 // pred_region
    _
  $region9: #{lstm_decoder_forward.3} parent=0 // pred_fallthru
    _
  // Predicated region
  $region10: #{lstm_decoder_forward.3} parent=0 // pred_check
    _
  $region11: #{lstm_decoder_forward.3} parent=0 // pred_check_branch
    %21 = sbr.rel (0) target = $region13
  $region12: #{lstm_decoder_forward.3} parent=0 // pred_region
    _
  $region13: #{lstm_decoder_forward.3} parent=0 // pred_fallthru
    _
  // Predicated region
  $region14: #{lstm_decoder_forward.3} parent=0 // pred_check
    _
  $region15: #{lstm_decoder_forward.3} parent=0 // pred_check_branch
    %23 = sbr.rel (0) target = $region17
  $region16: #{lstm_decoder_forward.3} parent=0 // pred_region
    _
  $region17: #{lstm_decoder_forward.3} parent=0 // pred_fallthru
    _
  // Predicated region
  $region18: #{lstm_decoder_forward.3} parent=0 // pred_check
    _
  $region19: #{lstm_decoder_forward.3} parent=0 // pred_check_branch
    %25 = sbr.rel (0) target = $region21
  $region20: #{lstm_decoder_forward.3} parent=0 // pred_region
    _
  $region21: #{lstm_decoder_forward.3} parent=0 // pred_fallthru
    _
  // Predicated region
  $region22: #{lstm_decoder_forward.3} parent=0 // pred_check
    _
  $region23: #{lstm_decoder_forward.3} parent=0 // pred_check_branch
    %27 = sbr.rel (0) target = $region25
  $region24: #{lstm_decoder_forward.3} parent=0 // pred_region
    _
  $region25: #{lstm_decoder_forward.3} parent=0 // pred_fallthru
    _
  %v28 = vld [vmem:[%s0] sm:$0xff]
  %v29 = vld [vmem:[%s1] sm:$0xff]
  %v30 = vld [vmem:[%s1 + $0x8] sm:$0xff]
  %v31 = vld [vmem:[%s1 + $0x10] sm:$0xff]
  %v32 = vld [vmem:[%s1 + $0x18] sm:$0xff]
  %v33 = vld [vmem:[%s1 + $0x20] sm:$0xff]
  %v34 = vld [vmem:[%s1 + $0x28] sm:$0xff]
  %v35 = vld [vmem:[%s1 + $0x30] sm:$0xff]
  %v36 = vld [vmem:[%s1 + $0x38] sm:$0xff]
  %v37 = vld [vmem:[%s1 + $0x40] sm:$0xff]
  %v38 = vld [vmem:[%s1 + $0x48] sm:$0xff]
  %v39 = vld [vmem:[%s1 + $0x50] sm:$0xff]
  %v40 = vld [vmem:[%s1 + $0x58] sm:$0xff]
  %v41 = vld [vmem:[%s1 + $0x60] sm:$0xff]
  %v42 = vld [vmem:[%s1 + $0x68] sm:$0xff]
  %v43 = vld [vmem:[%s1 + $0x70] sm:$0xff]
  %v44 = vld [vmem:[%s1 + $0x78] sm:$0xff]
  %v45 = vld [vmem:[%s2] sm:$0x1]
  %v47 = vlaneseq
  %v48 = vshrl.u32 %v47, 7
  %v49 = vsub.s32 0, %v48
  %v50 = vrot.slane %v45, %v49
  %52 = vmatprep.subr.mxu0 0.0
  %53 = vmatpush1.msra.mxu0 %v44
  %54 = vmatprep.subr.mxu0 0.0
  %55 = vmatpush1.msra.mxu0 %v43
  %56 = vmatprep.subr.mxu0 0.0
  %57 = vmatpush1.msra.mxu0 %v42
  %58 = vmatprep.subr.mxu0 0.0
  %59 = vmatpush1.msra.mxu0 %v41
  %60 = vmatprep.subr.mxu0 0.0
  %61 = vmatpush1.msra.mxu0 %v40
  %62 = vmatprep.subr.mxu0 0.0
  %63 = vmatpush1.msra.mxu0 %v39
  %64 = vmatprep.subr.mxu0 0.0
  %65 = vmatpush1.msra.mxu0 %v38
  %66 = vmatprep.subr.mxu0 0.0
  %67 = vmatpush1.msra.mxu0 %v37
  %68 = vmatprep.subr.mxu0 0.0
  %69 = vmatpush1.msra.mxu0 %v36
  %70 = vmatprep.subr.mxu0 0.0
  %71 = vmatpush1.msra.mxu0 %v35
  %72 = vmatprep.subr.mxu0 0.0
  %73 = vmatpush1.msra.mxu0 %v34
  %74 = vmatprep.subr.mxu0 0.0
  %75 = vmatpush1.msra.mxu0 %v33
  %76 = vmatprep.subr.mxu0 0.0
  %77 = vmatpush1.msra.mxu0 %v32
  %78 = vmatprep.subr.mxu0 0.0
  %79 = vmatpush1.msra.mxu0 %v31
  %80 = vmatprep.subr.mxu0 0.0
  %81 = vmatpush1.msra.mxu0 %v30
  %82 = vmatprep.subr.mxu0 0.0
  %83 = vmatpush1.msra.mxu0 %v29
  %84 = vmatprep.subr.mxu0 0.0
  %85 = vmatpush2.msra.mxu0 0.0
  %86 = vmatprep.subr.mxu0 0.0
  %87 = vmatpush2.msra.mxu0 0.0
  %88 = vmatprep.subr.mxu0 0.0
  %89 = vmatpush2.msra.mxu0 0.0
  %90 = vmatprep.subr.mxu0 0.0
  %91 = vmatpush2.msra.mxu0 0.0
  %92 = vmatprep.subr.mxu0 0.0
  %93 = vmatpush2.msra.mxu0 0.0
  %94 = vmatprep.subr.mxu0 0.0
  %95 = vmatpush2.msra.mxu0 0.0
  %96 = vmatprep.subr.mxu0 0.0
  %97 = vmatpush2.msra.mxu0 0.0
  %98 = vmatprep.subr.mxu0 0.0
  %99 = vmatpush2.msra.mxu0 0.0
  %100 = vmatprep.subr.mxu0 0.0
  %101 = vmatpush2.msra.mxu0 0.0
  %102 = vmatprep.subr.mxu0 0.0
  %103 = vmatpush2.msra.mxu0 0.0
  %104 = vmatprep.subr.mxu0 0.0
  %105 = vmatpush2.msra.mxu0 0.0
  %106 = vmatprep.subr.mxu0 0.0
  %107 = vmatpush2.msra.mxu0 0.0
  %108 = vmatprep.subr.mxu0 0.0
  %109 = vmatpush2.msra.mxu0 0.0
  %110 = vmatprep.subr.mxu0 0.0
  %111 = vmatpush2.msra.mxu0 0.0
  %112 = vmatprep.subr.mxu0 0.0
  %113 = vmatpush2.msra.mxu0 0.0
  %114 = vmatprep.subr.mxu0 0.0
  %115 = vmatpush2.msra.mxu0 0.0
  %116 = vmatprep.mubr.f32.mxu0 0.0
  %117 = vmatmul.mubr.f32.gmra.mxu0 %v28
  %v118 = vpop.f32.mrf.mxu0
  %v119 = vadd.f32 %v50, %v118
  %v120 = vpop.f32.mrf.mxu0
  %121 = vdwg.mxu0
  %v122 = vxor.u32 %v119, 2147483648
  %v123 = vmul.f32 %v122, 1.442695
  %v124 = vpow.pop %v123
  %v125 = vadd.f32 %v124, 1.0
  %v126 = vrcp.pop %v125
  %v127 = vmul.f32 1.0, %v126
  %v128 = vtanh.pop %v119
  %v129 = vld [vmem:[%s3] sm:$0xff]
  %131 = vrot.lane.b32.xlu0 %v129, 32
  %v132 = vpop.permute.xlu0 %131
  %v134 = vmul.f32 %v127, %v132
  %136 = vrot.lane.b32.xlu0 %v128, 64
  %v137 = vpop.permute.xlu0 %136
  %v139 = vmul.f32 %v127, %v137
  %141 = vrot.lane.b32.xlu0 %v139, 32
  %v142 = vpop.permute.xlu0 %141
  %v144 = vadd.f32 %v134, %v142
  %v145 = vtanh.pop %v144
  %147 = vrot.lane.b32.xlu0 %v145, 64
  %v148 = vpop.permute.xlu0 %147
  %v150 = vmul.f32 %v127, %v148
  %152 = vrot.lane.b32.xlu0 %v150, 32
  %v153 = vpop.permute.xlu0 %152
  %vm155 = vcmask 261120
  %156 = vst.msk [vmem:[%s6] sm:$0xff] %vm155, %v153
  %158 = vrot.lane.b32.xlu0 %v144, 96
  %v159 = vpop.permute.xlu0 %158
  %161 = vst.msk [vmem:[%s7] sm:$0xff] %vm155, %v159
  %v162 = vld [vmem:[%s4] sm:$0x1]
  %v164 = vlaneseq
  %v165 = vshrl.u32 %v164, 7
  %v166 = vsub.s32 0, %v165
  %v167 = vrot.slane %v162, %v166
  %168 = vrot.lane.b32.xlu0 %v167, 96
  %v169 = vpop.permute.xlu0 %168
  %v171 = vmul.f32 %v150, %v169
  %173 = vrot.lane.b32.xlu0 %v171, 32
  %v174 = vpop.permute.xlu0 %173
  %v176 = vsel %vm155, %v174, 0.0
  %177 = vadd.xlane.f32.xlu0 %v176
  %v178 = vpop.xlane.xlu0 %177
  %v179 = vld [vmem:[#allocation2] sm:$0x1]
  %v181 = vlaneseq
  %v182 = vshrl.u32 %v181, 7
  %v183 = vsub.s32 0, %v182
  %v184 = vrot.slane %v179, %v183
  %v186 = vadd.f32 %v178, %v184
  %vm187 = vcmask 7168
  %188 = vst.msk [vmem:[%s8] sm:$0xff] %vm187, %v186
  // Predicated region
  $region26: #{lstm_decoder_forward.3} parent=0 // pred_check
    _
  $region27: #{lstm_decoder_forward.3} parent=0 // pred_check_branch
    %190 = sbr.rel (0) target = $region29
  $region28: #{lstm_decoder_forward.3} parent=0 // pred_region
    _
  $region29: #{lstm_decoder_forward.3} parent=0 // pred_fallthru
    _
  // Predicated region
  $region30: #{lstm_decoder_forward.3} parent=0 // pred_check
    _
  $region31: #{lstm_decoder_forward.3} parent=0 // pred_check_branch
    %192 = sbr.rel (0) target = $region33
  $region32: #{lstm_decoder_forward.3} parent=0 // pred_region
    _
  $region33: #{lstm_decoder_forward.3} parent=0 // pred_fallthru
    _
  // Predicated region
  $region34: #{lstm_decoder_forward.3} parent=0 // pred_check
    _
  $region35: #{lstm_decoder_forward.3} parent=0 // pred_check_branch
    %194 = sbr.rel (0) target = $region37
  $region36: #{lstm_decoder_forward.3} parent=0 // pred_region
    _
  $region37: #{lstm_decoder_forward.3} parent=0 // pred_fallthru
    _
  // Predicated region
  $region38: #{lstm_decoder_forward.3} parent=0 // pred_check
    _
  $region39: #{lstm_decoder_forward.3} parent=0 // pred_check_branch
    %196 = sbr.rel (0) target = $region41
  $region40: #{lstm_decoder_forward.3} parent=0 // pred_region
    _
  $region41: #{lstm_decoder_forward.3} parent=0 // pred_fallthru
    _
  // Predicated region
  $region42: #{lstm_decoder_forward.3} parent=0 // pred_check
    _
  $region43: #{lstm_decoder_forward.3} parent=0 // pred_check_branch
    %198 = sbr.rel (0) target = $region45
  $region44: #{lstm_decoder_forward.3} parent=0 // pred_region
    _
  $region45: #{lstm_decoder_forward.3} parent=0 // pred_fallthru
    _
  // Predicated region
  $region46: #{lstm_decoder_forward.3} parent=0 // pred_check
    _
  $region47: #{lstm_decoder_forward.3} parent=0 // pred_check_branch
    %200 = sbr.rel (0) target = $region49
  $region48: #{lstm_decoder_forward.3} parent=0 // pred_region
    _
  $region49: #{lstm_decoder_forward.3} parent=0 // pred_fallthru
    _

</llo_original>
